<compile_context>
chip_gen: v7x
topology: tpu7x:2x2x1
jax: 0.10.0
libtpu: 0.0.40
codegen_flags: <defaults>
</compile_context>

<pallas_src>
import functools

import jax
import jax.numpy as jnp
from jax.experimental import pallas as pl
from jax.experimental.pallas import tpu as pltpu


def _equivariant_nonlin_kernel(x_ref, gamma_ref, beta_ref, o_ref, *,
                               nonlinearity, epsilon, ln_eps, norm):
    x = x_ref[...].astype(jnp.float32)                    # (TS, ncomp, nfeat)

    # Invariant: x_inv[i, f] = sum_m x[i, m, f]^2  (reduce over components).
    x_inv = jnp.sum(x * x, axis=1)                        # (TS, nfeat)
    x_inv = jnp.sqrt(x_inv + epsilon)
    x_inv = nonlinearity(x_inv)

    if norm:
        # Per-row LayerNorm over the feature axis (torch.nn.LayerNorm(nfeat)):
        # biased variance, eps = ln_eps, affine gamma/beta.
        mean = jnp.mean(x_inv, axis=-1, keepdims=True)
        xc = x_inv - mean
        var = jnp.mean(xc * xc, axis=-1, keepdims=True)
        x_inv = xc * jax.lax.rsqrt(var + ln_eps)
        x_inv = x_inv * gamma_ref[...] + beta_ref[...]    # (1, nfeat) bcast

    # out[i, m, f] = x_inv[i, f] * x[i, m, f]
    o_ref[...] = (x_inv[:, None, :] * x).astype(o_ref.dtype)


def equivariant_nonlinearity(x, gamma=None, beta=None, *,
                             nonlinearity=jax.nn.silu,
                             epsilon=1e-6, norm=True, ln_eps=1e-5,
                             block_rows=None):
    """Fused Pallas implementation of EquivariantNonLinearity.forward."""
    nstr, ncomp, nfeat = x.shape

    if gamma is None:
        gamma = jnp.ones((nfeat,), jnp.float32)
    if beta is None:
        beta = jnp.zeros((nfeat,), jnp.float32)
    gamma = gamma.reshape(1, nfeat).astype(jnp.float32)
    beta = beta.reshape(1, nfeat).astype(jnp.float32)

    # Tile nstr so each input block is ~1 MiB (and at least 8 rows) to stay
    # well above the per-grid-step pipeline overhead.
    if block_rows is None:
        row_bytes = ncomp * nfeat * x.dtype.itemsize
        block_rows = max(8, (1 << 20) // max(row_bytes, 1))
    block_rows = max(1, int(min(block_rows, nstr)))

    # Zero-pad nstr to a multiple of block_rows; padded rows yield exact zeros.
    padded = pl.cdiv(nstr, block_rows) * block_rows
    x_in = jnp.pad(x, ((0, padded - nstr), (0, 0), (0, 0))) if padded != nstr else x

    kernel = functools.partial(_equivariant_nonlin_kernel,
                               nonlinearity=nonlinearity,
                               epsilon=epsilon, ln_eps=ln_eps, norm=norm)

    out = pl.pallas_call(
        kernel,
        grid=(padded // block_rows,),
        in_specs=[
            pl.BlockSpec((block_rows, ncomp, nfeat), lambda i: (i, 0, 0)),
            pl.BlockSpec((1, nfeat), lambda i: (0, 0)),
            pl.BlockSpec((1, nfeat), lambda i: (0, 0)),
        ],
        out_specs=pl.BlockSpec((block_rows, ncomp, nfeat), lambda i: (i, 0, 0)),
        out_shape=jax.ShapeDtypeStruct((padded, ncomp, nfeat), x.dtype),
        compiler_params=pltpu.CompilerParams(
            dimension_semantics=("parallel",)),
    )(x_in, gamma, beta)

    return out[:nstr] if padded != nstr else out


def _reference(x, gamma, beta, *, nonlinearity, epsilon, norm, ln_eps):
    x = x.astype(jnp.float32)
    x_inv = jnp.einsum('imf,imf->if', x, x)
    x_inv = jnp.sqrt(x_inv + epsilon)
    x_inv = nonlinearity(x_inv)
    if norm:
        mean = jnp.mean(x_inv, axis=-1, keepdims=True)
        var = jnp.var(x_inv, axis=-1, keepdims=True)      # biased, like torch LN
        x_inv = (x_inv - mean) * jax.lax.rsqrt(var + ln_eps)
        x_inv = x_inv * gamma + beta
    return jnp.einsum('if,imf->imf', x_inv, x)


if __name__ == "__main__":
    # nstr structures, ncomp = 2l+1 components (l=2), nfeat = layersize.
    # nfeat = 128 keeps loads/stores lane-dense.
    nstr, ncomp, nfeat = 12, 5, 128
    epsilon = 1e-6      # module epsilon (sqrt guard)
    ln_eps = 1e-5       # torch.nn.LayerNorm default eps
    # The module takes an arbitrary callable nonlinearity; SiLU is used here.
    nonlin = jax.nn.silu

    key = jax.random.PRNGKey(0)
    kx, kg, kb = jax.random.split(key, 3)
    x = jax.random.normal(kx, (nstr, ncomp, nfeat), dtype=jnp.float32)
    gamma = jax.random.normal(kg, (nfeat,), dtype=jnp.float32)  # LN weight
    beta = jax.random.normal(kb, (nfeat,), dtype=jnp.float32)   # LN bias

    ok = True
    for norm in (True, False):
        out = equivariant_nonlinearity(x, gamma, beta, nonlinearity=nonlin,
                                       epsilon=epsilon, norm=norm,
                                       ln_eps=ln_eps)
        out = jax.block_until_ready(out)
        ref = _reference(x, gamma, beta, nonlinearity=nonlin,
                         epsilon=epsilon, norm=norm, ln_eps=ln_eps)
        if not jnp.allclose(out, ref, atol=1e-5, rtol=1e-5):
            ok = False

    # Exercise the row-padding path (nstr not a multiple of block_rows).
    out = equivariant_nonlinearity(x, gamma, beta, nonlinearity=nonlin,
                                   epsilon=epsilon, norm=True, ln_eps=ln_eps,
                                   block_rows=8)
    out = jax.block_until_ready(out)
    ref = _reference(x, gamma, beta, nonlinearity=nonlin,
                     epsilon=epsilon, norm=True, ln_eps=ln_eps)
    if not jnp.allclose(out, ref, atol=1e-5, rtol=1e-5):
        ok = False

    if ok:
        print("KERNEL_OK")
</pallas_src>

<mosaic_0001>
module attributes {stable_mosaic.version = 11 : i64} {
  func.func @_equivariant_nonlin_kernel(%arg0: i32, %arg1: memref<12x5x128xf32, #tpu.memory_space<vmem>>, %arg2: memref<1x128xf32, #tpu.memory_space<vmem>>, %arg3: memref<1x128xf32, #tpu.memory_space<vmem>>, %arg4: memref<12x5x128xf32, #tpu.memory_space<vmem>>) attributes {dimension_semantics = [#tpu.dimension_semantics<parallel>], iteration_bounds = array<i64: 1>, scalar_prefetch = 0 : i64, scratch_operands = 0 : i64, tpu.core_type = #tpu.core_type<tc>, window_params = [{transform_indices = @transform_0, window_bounds = array<i64: 12, 5, 128>}, {pipeline_mode = #tpu.pipeline_mode<synchronous>, transform_indices = @transform_1, window_bounds = array<i64: 1, 128>}, {pipeline_mode = #tpu.pipeline_mode<synchronous>, transform_indices = @transform_2, window_bounds = array<i64: 1, 128>}, {transform_indices = @transform_3, window_bounds = array<i64: 12, 5, 128>}]} {
    %c0 = arith.constant 0 : index
    %c0_0 = arith.constant 0 : index
    %c0_1 = arith.constant 0 : index
    %0 = vector.load %arg1[%c0, %c0_0, %c0_1] : memref<12x5x128xf32, #tpu.memory_space<vmem>>, vector<12x5x128xf32>
    %1 = arith.mulf %0, %0 : vector<12x5x128xf32>
    %cst = arith.constant dense<0.000000e+00> : vector<12x128xf32>
    %2 = vector.multi_reduction <add>, %1, %cst [1] : vector<12x5x128xf32> to vector<12x128xf32>
    %cst_2 = arith.constant 9.99999997E-7 : f32
    %3 = vector.broadcast %cst_2 : f32 to vector<12x128xf32>
    %4 = arith.addf %2, %3 : vector<12x128xf32>
    %5 = math.sqrt %4 : vector<12x128xf32>
    %6 = arith.negf %5 : vector<12x128xf32>
    %7 = math.exp %6 : vector<12x128xf32>
    %cst_3 = arith.constant 1.000000e+00 : f32
    %8 = vector.broadcast %cst_3 : f32 to vector<12x128xf32>
    %9 = arith.addf %8, %7 : vector<12x128xf32>
    %10 = arith.divf %8, %9 : vector<12x128xf32>
    %11 = arith.mulf %5, %10 : vector<12x128xf32>
    %cst_4 = arith.constant dense<0.000000e+00> : vector<12xf32>
    %12 = vector.multi_reduction <add>, %11, %cst_4 [1] : vector<12x128xf32> to vector<12xf32>
    %13 = vector.shape_cast %12 : vector<12xf32> to vector<12x1xf32>
    %cst_5 = arith.constant 1.280000e+02 : f32
    %14 = vector.broadcast %cst_5 : f32 to vector<12x1xf32>
    %15 = arith.divf %13, %14 : vector<12x1xf32>
    %16 = vector.broadcast %15 : vector<12x1xf32> to vector<12x128xf32>
    %17 = arith.subf %11, %16 : vector<12x128xf32>
    %18 = arith.mulf %17, %17 : vector<12x128xf32>
    %cst_6 = arith.constant dense<0.000000e+00> : vector<12xf32>
    %19 = vector.multi_reduction <add>, %18, %cst_6 [1] : vector<12x128xf32> to vector<12xf32>
    %20 = vector.shape_cast %19 : vector<12xf32> to vector<12x1xf32>
    %cst_7 = arith.constant 1.280000e+02 : f32
    %21 = vector.broadcast %cst_7 : f32 to vector<12x1xf32>
    %22 = arith.divf %20, %21 : vector<12x1xf32>
    %cst_8 = arith.constant 9.99999974E-6 : f32
    %23 = vector.broadcast %cst_8 : f32 to vector<12x1xf32>
    %24 = arith.addf %22, %23 : vector<12x1xf32>
    %25 = math.rsqrt %24 : vector<12x1xf32>
    %26 = vector.broadcast %25 : vector<12x1xf32> to vector<12x128xf32>
    %27 = arith.mulf %17, %26 : vector<12x128xf32>
    %c0_9 = arith.constant 0 : index
    %c0_10 = arith.constant 0 : index
    %28 = vector.load %arg2[%c0_9, %c0_10] : memref<1x128xf32, #tpu.memory_space<vmem>>, vector<1x128xf32>
    %29 = vector.broadcast %28 : vector<1x128xf32> to vector<12x128xf32>
    %30 = arith.mulf %27, %29 : vector<12x128xf32>
    %c0_11 = arith.constant 0 : index
    %c0_12 = arith.constant 0 : index
    %31 = vector.load %arg3[%c0_11, %c0_12] : memref<1x128xf32, #tpu.memory_space<vmem>>, vector<1x128xf32>
    %32 = vector.broadcast %31 : vector<1x128xf32> to vector<12x128xf32>
    %33 = arith.addf %30, %32 : vector<12x128xf32>
    %34 = vector.shape_cast %33 : vector<12x128xf32> to vector<12x1x128xf32>
    %35 = vector.broadcast %34 : vector<12x1x128xf32> to vector<12x5x128xf32>
    %36 = arith.mulf %35, %0 : vector<12x5x128xf32>
    %c0_13 = arith.constant 0 : index
    %c0_14 = arith.constant 0 : index
    %c0_15 = arith.constant 0 : index
    %37 = vector.load %arg4[%c0_13, %c0_14, %c0_15] : memref<12x5x128xf32, #tpu.memory_space<vmem>>, vector<12x5x128xf32>
    tpu.vector_store %arg4[%c0_13, %c0_14, %c0_15], %36 {strides = array<i32>} : memref<12x5x128xf32, #tpu.memory_space<vmem>>, vector<12x5x128xf32>,
    return
  }
  func.func @transform_0(%arg0: i32) -> (i32, i32, i32) {
    %c0_i32 = arith.constant 0 : i32
    %c0_i32_0 = arith.constant 0 : i32
    %c0_i32_1 = arith.constant 0 : i32
    return %arg0, %c0_i32, %c0_i32_0 : i32, i32, i32
  }
  func.func @transform_1(%arg0: i32) -> (i32, i32) {
    %c0_i32 = arith.constant 0 : i32
    %c0_i32_0 = arith.constant 0 : i32
    %c0_i32_1 = arith.constant 0 : i32
    return %c0_i32, %c0_i32_0 : i32, i32
  }
  func.func @transform_2(%arg0: i32) -> (i32, i32) {
    %c0_i32 = arith.constant 0 : i32
    %c0_i32_0 = arith.constant 0 : i32
    %c0_i32_1 = arith.constant 0 : i32
    return %c0_i32, %c0_i32_0 : i32, i32
  }
  func.func @transform_3(%arg0: i32) -> (i32, i32, i32) {
    %c0_i32 = arith.constant 0 : i32
    %c0_i32_0 = arith.constant 0 : i32
    %c0_i32_1 = arith.constant 0 : i32
    return %arg0, %c0_i32, %c0_i32_0 : i32, i32, i32
  }
}

</mosaic_0001>

<llo_original>
// kernel: tpu_custom_call.1
$region0: #{tpu_custom_call.1}
  #allocation0 [shape = 'u32[]', space=smem, size = 0x4, offset = 0x4, fixed_abs, tag = 'smem constant byte address 0x4 - core index']
  #allocation1 [shape = 'u32[144,128]{1,0:T(1,128)}', space=vmem, size = 0x12000, scoped, tag = 'internal scratch']
  %s0 = inlined_call_operand.vmem [shape: f32[12,5,128], index: 0, kind: input, shape index: {}]
  %s1 = inlined_call_operand.vmem [shape: f32[1,128], index: 1, kind: input, shape index: {}]
  %s2 = inlined_call_operand.vmem [shape: f32[1,128], index: 2, kind: input, shape index: {}]
  %s3 = inlined_call_operand.vmem [shape: f32[12,5,128], index: 3, kind: output, shape index: {}]
  %s4 = sld [smem:[#allocation0]]
  $region22: #{tpu_custom_call.1} parent=0
    _
  %s6 = ssub.s32 1, %s4
  %s7 = scalar_select 0, %s6, %s4
  // Predicated region
  $region2: #{tpu_custom_call.1} parent=0 // pred_check
    _
  $region3: #{tpu_custom_call.1} parent=0 // pred_check_branch
    %9 = sbr.rel (0) target = $region5
  $region4: #{tpu_custom_call.1} parent=0 // pred_region
    _
  $region5: #{tpu_custom_call.1} parent=0 // pred_fallthru
    _
  // Predicated region
  $region6: #{tpu_custom_call.1} parent=0 // pred_check
    _
  $region7: #{tpu_custom_call.1} parent=0 // pred_check_branch
    %11 = sbr.rel (0) target = $region9
  $region8: #{tpu_custom_call.1} parent=0 // pred_region
    _
  $region9: #{tpu_custom_call.1} parent=0 // pred_fallthru
    _
  // Predicated region
  $region10: #{tpu_custom_call.1} parent=0 // pred_check
    _
  $region11: #{tpu_custom_call.1} parent=0 // pred_check_branch
    %13 = sbr.rel (0) target = $region13
  $region12: #{tpu_custom_call.1} parent=0 // pred_region
    _
  $region13: #{tpu_custom_call.1} parent=0 // pred_fallthru
    _
  %v14 = vld [vmem:[%s0] sm:$0x1f]
  %v15 = vld [vmem:[%s0 + $0x8] sm:$0x1f]
  %v16 = vld [vmem:[%s0 + $0x10] sm:$0x1f]
  %v17 = vld [vmem:[%s0 + $0x18] sm:$0x1f]
  %v18 = vld [vmem:[%s0 + $0x20] sm:$0x1f]
  %v19 = vld [vmem:[%s0 + $0x28] sm:$0x1f]
  %v20 = vld [vmem:[%s0 + $0x30] sm:$0x1f]
  %v21 = vld [vmem:[%s0 + $0x38] sm:$0x1f]
  %v22 = vld [vmem:[%s0 + $0x40] sm:$0x1f]
  %v23 = vld [vmem:[%s0 + $0x48] sm:$0x1f]
  %v24 = vld [vmem:[%s0 + $0x50] sm:$0x1f]
  %v25 = vld [vmem:[%s0 + $0x58] sm:$0x1f]
  %v26 = vmul.f32 %v14, %v14
  %v27 = vmul.f32 %v15, %v15
  %v28 = vmul.f32 %v16, %v16
  %v29 = vmul.f32 %v17, %v17
  %v30 = vmul.f32 %v18, %v18
  %v31 = vmul.f32 %v19, %v19
  %v32 = vmul.f32 %v20, %v20
  %v33 = vmul.f32 %v21, %v21
  %v34 = vmul.f32 %v22, %v22
  %v35 = vmul.f32 %v23, %v23
  %v36 = vmul.f32 %v24, %v24
  %v37 = vmul.f32 %v25, %v25
  %vm38 = vcmask 1044480
  %v39 = vsel %vm38, %v26, 0.0
  %v40 = vrot.slane %v39, 4
  %v41 = vadd.f32 %v39, %v40
  %v42 = vrot.slane %v41, 2
  %v43 = vadd.f32 %v41, %v42
  %v44 = vrot.slane %v43, 1
  %v45 = vadd.f32 %v43, %v44
  %v46 = vsel %vm38, %v27, 0.0
  %v47 = vrot.slane %v46, 4
  %v48 = vadd.f32 %v46, %v47
  %v49 = vrot.slane %v48, 2
  %v50 = vadd.f32 %v48, %v49
  %v51 = vrot.slane %v50, 1
  %v52 = vadd.f32 %v50, %v51
  %v53 = vsel %vm38, %v28, 0.0
  %v54 = vrot.slane %v53, 4
  %v55 = vadd.f32 %v53, %v54
  %v56 = vrot.slane %v55, 2
  %v57 = vadd.f32 %v55, %v56
  %v58 = vrot.slane %v57, 1
  %v59 = vadd.f32 %v57, %v58
  %v60 = vsel %vm38, %v29, 0.0
  %v61 = vrot.slane %v60, 4
  %v62 = vadd.f32 %v60, %v61
  %v63 = vrot.slane %v62, 2
  %v64 = vadd.f32 %v62, %v63
  %v65 = vrot.slane %v64, 1
  %v66 = vadd.f32 %v64, %v65
  %v67 = vsel %vm38, %v30, 0.0
  %v68 = vrot.slane %v67, 4
  %v69 = vadd.f32 %v67, %v68
  %v70 = vrot.slane %v69, 2
  %v71 = vadd.f32 %v69, %v70
  %v72 = vrot.slane %v71, 1
  %v73 = vadd.f32 %v71, %v72
  %v74 = vsel %vm38, %v31, 0.0
  %v75 = vrot.slane %v74, 4
  %v76 = vadd.f32 %v74, %v75
  %v77 = vrot.slane %v76, 2
  %v78 = vadd.f32 %v76, %v77
  %v79 = vrot.slane %v78, 1
  %v80 = vadd.f32 %v78, %v79
  %v81 = vsel %vm38, %v32, 0.0
  %v82 = vrot.slane %v81, 4
  %v83 = vadd.f32 %v81, %v82
  %v84 = vrot.slane %v83, 2
  %v85 = vadd.f32 %v83, %v84
  %v86 = vrot.slane %v85, 1
  %v87 = vadd.f32 %v85, %v86
  %v88 = vsel %vm38, %v33, 0.0
  %v89 = vrot.slane %v88, 4
  %v90 = vadd.f32 %v88, %v89
  %v91 = vrot.slane %v90, 2
  %v92 = vadd.f32 %v90, %v91
  %v93 = vrot.slane %v92, 1
  %v94 = vadd.f32 %v92, %v93
  %v95 = vsel %vm38, %v34, 0.0
  %v96 = vrot.slane %v95, 4
  %v97 = vadd.f32 %v95, %v96
  %v98 = vrot.slane %v97, 2
  %v99 = vadd.f32 %v97, %v98
  %v100 = vrot.slane %v99, 1
  %v101 = vadd.f32 %v99, %v100
  %v102 = vsel %vm38, %v35, 0.0
  %v103 = vrot.slane %v102, 4
  %v104 = vadd.f32 %v102, %v103
  %v105 = vrot.slane %v104, 2
  %v106 = vadd.f32 %v104, %v105
  %v107 = vrot.slane %v106, 1
  %v108 = vadd.f32 %v106, %v107
  %v109 = vsel %vm38, %v36, 0.0
  %v110 = vrot.slane %v109, 4
  %v111 = vadd.f32 %v109, %v110
  %v112 = vrot.slane %v111, 2
  %v113 = vadd.f32 %v111, %v112
  %v114 = vrot.slane %v113, 1
  %v115 = vadd.f32 %v113, %v114
  %v116 = vsel %vm38, %v37, 0.0
  %v117 = vrot.slane %v116, 4
  %v118 = vadd.f32 %v116, %v117
  %v119 = vrot.slane %v118, 2
  %v120 = vadd.f32 %v118, %v119
  %v121 = vrot.slane %v120, 1
  %v122 = vadd.f32 %v120, %v121
  %v123 = vadd.f32 %v45, 1e-06
  %v124 = vadd.f32 %v52, 1e-06
  %v125 = vadd.f32 %v59, 1e-06
  %v126 = vadd.f32 %v66, 1e-06
  %v127 = vadd.f32 %v73, 1e-06
  %v128 = vadd.f32 %v80, 1e-06
  %v129 = vadd.f32 %v87, 1e-06
  %v130 = vadd.f32 %v94, 1e-06
  %v131 = vadd.f32 %v101, 1e-06
  %v132 = vadd.f32 %v108, 1e-06
  %v133 = vadd.f32 %v115, 1e-06
  %v134 = vadd.f32 %v122, 1e-06
  %v135 = vrsqrt.pop %v123
  %v136 = vmul.f32 %v123, %v135
  %vm137 = vcmp.eq.f32.partialorder %v123, inf
  %v138 = vsel %vm137, %v123, %v136
  %vm139 = vcmp.eq.f32.partialorder %v123, 0.0
  %v140 = vand.u32 %v123, 2147483648
  %v141 = vsel %vm139, %v140, %v138
  %v142 = vrsqrt.pop %v124
  %v143 = vmul.f32 %v124, %v142
  %vm144 = vcmp.eq.f32.partialorder %v124, inf
  %v145 = vsel %vm144, %v124, %v143
  %vm146 = vcmp.eq.f32.partialorder %v124, 0.0
  %v147 = vand.u32 %v124, 2147483648
  %v148 = vsel %vm146, %v147, %v145
  %v149 = vrsqrt.pop %v125
  %v150 = vmul.f32 %v125, %v149
  %vm151 = vcmp.eq.f32.partialorder %v125, inf
  %v152 = vsel %vm151, %v125, %v150
  %vm153 = vcmp.eq.f32.partialorder %v125, 0.0
  %v154 = vand.u32 %v125, 2147483648
  %v155 = vsel %vm153, %v154, %v152
  %v156 = vrsqrt.pop %v126
  %v157 = vmul.f32 %v126, %v156
  %vm158 = vcmp.eq.f32.partialorder %v126, inf
  %v159 = vsel %vm158, %v126, %v157
  %vm160 = vcmp.eq.f32.partialorder %v126, 0.0
  %v161 = vand.u32 %v126, 2147483648
  %v162 = vsel %vm160, %v161, %v159
  %v163 = vrsqrt.pop %v127
  %v164 = vmul.f32 %v127, %v163
  %vm165 = vcmp.eq.f32.partialorder %v127, inf
  %v166 = vsel %vm165, %v127, %v164
  %vm167 = vcmp.eq.f32.partialorder %v127, 0.0
  %v168 = vand.u32 %v127, 2147483648
  %v169 = vsel %vm167, %v168, %v166
  %v170 = vrsqrt.pop %v128
  %v171 = vmul.f32 %v128, %v170
  %vm172 = vcmp.eq.f32.partialorder %v128, inf
  %v173 = vsel %vm172, %v128, %v171
  %vm174 = vcmp.eq.f32.partialorder %v128, 0.0
  %v175 = vand.u32 %v128, 2147483648
  %v176 = vsel %vm174, %v175, %v173
  %v177 = vrsqrt.pop %v129
  %v178 = vmul.f32 %v129, %v177
  %vm179 = vcmp.eq.f32.partialorder %v129, inf
  %v180 = vsel %vm179, %v129, %v178
  %vm181 = vcmp.eq.f32.partialorder %v129, 0.0
  %v182 = vand.u32 %v129, 2147483648
  %v183 = vsel %vm181, %v182, %v180
  %v184 = vrsqrt.pop %v130
  %v185 = vmul.f32 %v130, %v184
  %vm186 = vcmp.eq.f32.partialorder %v130, inf
  %v187 = vsel %vm186, %v130, %v185
  %vm188 = vcmp.eq.f32.partialorder %v130, 0.0
  %v189 = vand.u32 %v130, 2147483648
  %v190 = vsel %vm188, %v189, %v187
  %v191 = vrsqrt.pop %v131
  %v192 = vmul.f32 %v131, %v191
  %vm193 = vcmp.eq.f32.partialorder %v131, inf
  %v194 = vsel %vm193, %v131, %v192
  %vm195 = vcmp.eq.f32.partialorder %v131, 0.0
  %v196 = vand.u32 %v131, 2147483648
  %v197 = vsel %vm195, %v196, %v194
  %v198 = vrsqrt.pop %v132
  %v199 = vmul.f32 %v132, %v198
  %vm200 = vcmp.eq.f32.partialorder %v132, inf
  %v201 = vsel %vm200, %v132, %v199
  %vm202 = vcmp.eq.f32.partialorder %v132, 0.0
  %v203 = vand.u32 %v132, 2147483648
  %v204 = vsel %vm202, %v203, %v201
  %v205 = vrsqrt.pop %v133
  %v206 = vmul.f32 %v133, %v205
  %vm207 = vcmp.eq.f32.partialorder %v133, inf
  %v208 = vsel %vm207, %v133, %v206
  %vm209 = vcmp.eq.f32.partialorder %v133, 0.0
  %v210 = vand.u32 %v133, 2147483648
  %v211 = vsel %vm209, %v210, %v208
  %v212 = vrsqrt.pop %v134
  %v213 = vmul.f32 %v134, %v212
  %vm214 = vcmp.eq.f32.partialorder %v134, inf
  %v215 = vsel %vm214, %v134, %v213
  %vm216 = vcmp.eq.f32.partialorder %v134, 0.0
  %v217 = vand.u32 %v134, 2147483648
  %v218 = vsel %vm216, %v217, %v215
  %v219 = vxor.u32 %v141, 2147483648
  %v220 = vxor.u32 %v148, 2147483648
  %v221 = vxor.u32 %v155, 2147483648
  %v222 = vxor.u32 %v162, 2147483648
  %v223 = vxor.u32 %v169, 2147483648
  %v224 = vxor.u32 %v176, 2147483648
  %v225 = vxor.u32 %v183, 2147483648
  %v226 = vxor.u32 %v190, 2147483648
  %v227 = vxor.u32 %v197, 2147483648
  %v228 = vxor.u32 %v204, 2147483648
  %v229 = vxor.u32 %v211, 2147483648
  %v230 = vxor.u32 %v218, 2147483648
  %v231 = vmul.f32 %v219, 1.442695
  %v232 = vpow.pop %v231
  %v233 = vmul.f32 %v220, 1.442695
  %v234 = vpow.pop %v233
  %v235 = vmul.f32 %v221, 1.442695
  %v236 = vpow.pop %v235
  %v237 = vmul.f32 %v222, 1.442695
  %v238 = vpow.pop %v237
  %v239 = vmul.f32 %v223, 1.442695
  %v240 = vpow.pop %v239
  %v241 = vmul.f32 %v224, 1.442695
  %v242 = vpow.pop %v241
  %v243 = vmul.f32 %v225, 1.442695
  %v244 = vpow.pop %v243
  %v245 = vmul.f32 %v226, 1.442695
  %v246 = vpow.pop %v245
  %v247 = vmul.f32 %v227, 1.442695
  %v248 = vpow.pop %v247
  %v249 = vmul.f32 %v228, 1.442695
  %v250 = vpow.pop %v249
  %v251 = vmul.f32 %v229, 1.442695
  %v252 = vpow.pop %v251
  %v253 = vmul.f32 %v230, 1.442695
  %v254 = vpow.pop %v253
  %v255 = vadd.f32 %v232, 1.0
  %v256 = vadd.f32 %v234, 1.0
  %v257 = vadd.f32 %v236, 1.0
  %v258 = vadd.f32 %v238, 1.0
  %v259 = vadd.f32 %v240, 1.0
  %v260 = vadd.f32 %v242, 1.0
  %v261 = vadd.f32 %v244, 1.0
  %v262 = vadd.f32 %v246, 1.0
  %v263 = vadd.f32 %v248, 1.0
  %v264 = vadd.f32 %v250, 1.0
  %v265 = vadd.f32 %v252, 1.0
  %v266 = vadd.f32 %v254, 1.0
  %v267 = vrcp.pop %v255
  %v268 = vmul.f32 1.0, %v267
  %v269 = vrcp.pop %v256
  %v270 = vmul.f32 1.0, %v269
  %v271 = vrcp.pop %v257
  %v272 = vmul.f32 1.0, %v271
  %v273 = vrcp.pop %v258
  %v274 = vmul.f32 1.0, %v273
  %v275 = vrcp.pop %v259
  %v276 = vmul.f32 1.0, %v275
  %v277 = vrcp.pop %v260
  %v278 = vmul.f32 1.0, %v277
  %v279 = vrcp.pop %v261
  %v280 = vmul.f32 1.0, %v279
  %v281 = vrcp.pop %v262
  %v282 = vmul.f32 1.0, %v281
  %v283 = vrcp.pop %v263
  %v284 = vmul.f32 1.0, %v283
  %v285 = vrcp.pop %v264
  %v286 = vmul.f32 1.0, %v285
  %v287 = vrcp.pop %v265
  %v288 = vmul.f32 1.0, %v287
  %v289 = vrcp.pop %v266
  %v290 = vmul.f32 1.0, %v289
  %v291 = vmul.f32 %v141, %v268
  %v292 = vmul.f32 %v148, %v270
  %v293 = vmul.f32 %v155, %v272
  %v294 = vmul.f32 %v162, %v274
  %v295 = vmul.f32 %v169, %v276
  %v296 = vmul.f32 %v176, %v278
  %v297 = vmul.f32 %v183, %v280
  %v298 = vmul.f32 %v190, %v282
  %v299 = vmul.f32 %v197, %v284
  %v300 = vmul.f32 %v204, %v286
  %v301 = vmul.f32 %v211, %v288
  %v302 = vmul.f32 %v218, %v290
  %vm315 = vcmask 1041409
  %v316 = vsel %vm315, %v292, %v291
  %vm317 = vcmask 1042434
  %v318 = vsel %vm317, %v293, %v316
  %vm319 = vcmask 1043459
  %v320 = vsel %vm319, %v294, %v318
  %vm321 = vcmask 1044484
  %v322 = vsel %vm321, %v295, %v320
  %vm323 = vcmask 1045509
  %v324 = vsel %vm323, %v296, %v322
  %vm325 = vcmask 1046534
  %v326 = vsel %vm325, %v297, %v324
  %vm327 = vcmask 1047559
  %v328 = vsel %vm327, %v298, %v326
  %v329 = vsel %vm315, %v300, %v299
  %v330 = vsel %vm317, %v301, %v329
  %v331 = vsel %vm319, %v302, %v330
  %334 = vadd.xlane.f32.xlu0 %v328
  %v335 = vpop.xlane.xlu0 %334
  %vm336 = vcmask 1043456
  %v337 = vsel %vm336, %v331, 0.0
  %338 = vadd.xlane.f32.xlu0 %v337
  %v339 = vpop.xlane.xlu0 %338
  %v340 = vrcp.pop 128.0
  %v341 = vmul.f32 %v335, %v340
  %v342 = vmul.f32 %v339, %v340
  %v345 = vrot.slane %v341, 1
  %v346 = vrot.slane %v341, 2
  %v347 = vrot.slane %v341, 3
  %v348 = vrot.slane %v341, 4
  %v349 = vrot.slane %v341, 5
  %v350 = vrot.slane %v341, 6
  %v351 = vrot.slane %v341, 7
  %v352 = vrot.slane %v342, 1
  %v353 = vrot.slane %v342, 2
  %v354 = vrot.slane %v342, 3
  %v367 = vsub.f32 %v291, %v341
  %v368 = vsub.f32 %v292, %v345
  %v369 = vsub.f32 %v293, %v346
  %v370 = vsub.f32 %v294, %v347
  %v371 = vsub.f32 %v295, %v348
  %v372 = vsub.f32 %v296, %v349
  %v373 = vsub.f32 %v297, %v350
  %v374 = vsub.f32 %v298, %v351
  %v375 = vsub.f32 %v299, %v342
  %v376 = vsub.f32 %v300, %v352
  %v377 = vsub.f32 %v301, %v353
  %v378 = vsub.f32 %v302, %v354
  %v379 = vmul.f32 %v367, %v367
  %v380 = vmul.f32 %v368, %v368
  %v381 = vmul.f32 %v369, %v369
  %v382 = vmul.f32 %v370, %v370
  %v383 = vmul.f32 %v371, %v371
  %v384 = vmul.f32 %v372, %v372
  %v385 = vmul.f32 %v373, %v373
  %v386 = vmul.f32 %v374, %v374
  %v387 = vmul.f32 %v375, %v375
  %v388 = vmul.f32 %v376, %v376
  %v389 = vmul.f32 %v377, %v377
  %v390 = vmul.f32 %v378, %v378
  %v403 = vrot.slane %v380, 7
  %v404 = vsel %vm315, %v403, %v379
  %v405 = vrot.slane %v381, 6
  %v406 = vsel %vm317, %v405, %v404
  %v407 = vrot.slane %v382, 5
  %v408 = vsel %vm319, %v407, %v406
  %v409 = vrot.slane %v383, 4
  %v410 = vsel %vm321, %v409, %v408
  %v411 = vrot.slane %v384, 3
  %v412 = vsel %vm323, %v411, %v410
  %v413 = vrot.slane %v385, 2
  %v414 = vsel %vm325, %v413, %v412
  %v415 = vrot.slane %v386, 1
  %v416 = vsel %vm327, %v415, %v414
  %v417 = vrot.slane %v388, 7
  %v418 = vsel %vm315, %v417, %v387
  %v419 = vrot.slane %v389, 6
  %v420 = vsel %vm317, %v419, %v418
  %v421 = vrot.slane %v390, 5
  %v422 = vsel %vm319, %v421, %v420
  %425 = vadd.xlane.f32.xlu0 %v416
  %v426 = vpop.xlane.xlu0 %425
  %v427 = vsel %vm336, %v422, 0.0
  %428 = vadd.xlane.f32.xlu0 %v427
  %v429 = vpop.xlane.xlu0 %428
  %v430 = vmul.f32 %v426, %v340
  %v431 = vmul.f32 %v429, %v340
  %v432 = vadd.f32 %v430, 1e-05
  %v433 = vadd.f32 %v431, 1e-05
  %v434 = vrsqrt.pop %v432
  %v435 = vrsqrt.pop %v433
  %v438 = vrot.slane %v434, 1
  %v439 = vrot.slane %v434, 2
  %v440 = vrot.slane %v434, 3
  %v441 = vrot.slane %v434, 4
  %v442 = vrot.slane %v434, 5
  %v443 = vrot.slane %v434, 6
  %v444 = vrot.slane %v434, 7
  %v445 = vrot.slane %v435, 1
  %v446 = vrot.slane %v435, 2
  %v447 = vrot.slane %v435, 3
  %v460 = vmul.f32 %v367, %v434
  %v461 = vmul.f32 %v368, %v438
  %v462 = vmul.f32 %v369, %v439
  %v463 = vmul.f32 %v370, %v440
  %v464 = vmul.f32 %v371, %v441
  %v465 = vmul.f32 %v372, %v442
  %v466 = vmul.f32 %v373, %v443
  %v467 = vmul.f32 %v374, %v444
  %v468 = vmul.f32 %v375, %v435
  %v469 = vmul.f32 %v376, %v445
  %v470 = vmul.f32 %v377, %v446
  %v471 = vmul.f32 %v378, %v447
  %v472 = vld [vmem:[%s1] sm:$0x1]
  %v474 = vlaneseq
  %v475 = vshrl.u32 %v474, 7
  %v476 = vsub.s32 0, %v475
  %v477 = vrot.slane %v472, %v476
  %v479 = vmul.f32 %v460, %v477
  %v480 = vmul.f32 %v461, %v477
  %v481 = vmul.f32 %v462, %v477
  %v482 = vmul.f32 %v463, %v477
  %v483 = vmul.f32 %v464, %v477
  %v484 = vmul.f32 %v465, %v477
  %v485 = vmul.f32 %v466, %v477
  %v486 = vmul.f32 %v467, %v477
  %v487 = vmul.f32 %v468, %v477
  %v488 = vmul.f32 %v469, %v477
  %v489 = vmul.f32 %v470, %v477
  %v490 = vmul.f32 %v471, %v477
  %v491 = vld [vmem:[%s2] sm:$0x1]
  %v493 = vlaneseq
  %v494 = vshrl.u32 %v493, 7
  %v495 = vsub.s32 0, %v494
  %v496 = vrot.slane %v491, %v495
  %v498 = vadd.f32 %v479, %v496
  %v499 = vadd.f32 %v480, %v496
  %v500 = vadd.f32 %v481, %v496
  %v501 = vadd.f32 %v482, %v496
  %v502 = vadd.f32 %v483, %v496
  %v503 = vadd.f32 %v484, %v496
  %v504 = vadd.f32 %v485, %v496
  %v505 = vadd.f32 %v486, %v496
  %v506 = vadd.f32 %v487, %v496
  %v507 = vadd.f32 %v488, %v496
  %v508 = vadd.f32 %v489, %v496
  %v509 = vadd.f32 %v490, %v496
  %v510 = vlaneseq
  %v511 = vshrl.u32 %v510, 7
  %v512 = vsub.s32 0, %v511
  %v513 = vrot.slane %v498, %v512
  %v514 = vlaneseq
  %v515 = vshrl.u32 %v514, 7
  %v516 = vsub.s32 0, %v515
  %v517 = vrot.slane %v499, %v516
  %v518 = vlaneseq
  %v519 = vshrl.u32 %v518, 7
  %v520 = vsub.s32 0, %v519
  %v521 = vrot.slane %v500, %v520
  %v522 = vlaneseq
  %v523 = vshrl.u32 %v522, 7
  %v524 = vsub.s32 0, %v523
  %v525 = vrot.slane %v501, %v524
  %v526 = vlaneseq
  %v527 = vshrl.u32 %v526, 7
  %v528 = vsub.s32 0, %v527
  %v529 = vrot.slane %v502, %v528
  %v530 = vlaneseq
  %v531 = vshrl.u32 %v530, 7
  %v532 = vsub.s32 0, %v531
  %v533 = vrot.slane %v503, %v532
  %v534 = vlaneseq
  %v535 = vshrl.u32 %v534, 7
  %v536 = vsub.s32 0, %v535
  %v537 = vrot.slane %v504, %v536
  %v538 = vlaneseq
  %v539 = vshrl.u32 %v538, 7
  %v540 = vsub.s32 0, %v539
  %v541 = vrot.slane %v505, %v540
  %v542 = vlaneseq
  %v543 = vshrl.u32 %v542, 7
  %v544 = vsub.s32 0, %v543
  %v545 = vrot.slane %v506, %v544
  %v546 = vlaneseq
  %v547 = vshrl.u32 %v546, 7
  %v548 = vsub.s32 0, %v547
  %v549 = vrot.slane %v507, %v548
  %v550 = vlaneseq
  %v551 = vshrl.u32 %v550, 7
  %v552 = vsub.s32 0, %v551
  %v553 = vrot.slane %v508, %v552
  %v554 = vlaneseq
  %v555 = vshrl.u32 %v554, 7
  %v556 = vsub.s32 0, %v555
  %v557 = vrot.slane %v509, %v556
  %v558 = vmul.f32 %v513, %v14
  %v559 = vmul.f32 %v517, %v15
  %v560 = vmul.f32 %v521, %v16
  %v561 = vmul.f32 %v525, %v17
  %v562 = vmul.f32 %v529, %v18
  %v563 = vmul.f32 %v533, %v19
  %v564 = vmul.f32 %v537, %v20
  %v565 = vmul.f32 %v541, %v21
  %v566 = vmul.f32 %v545, %v22
  %v567 = vmul.f32 %v549, %v23
  %v568 = vmul.f32 %v553, %v24
  %v569 = vmul.f32 %v557, %v25
  %570 = vst [vmem:[%s3] sm:$0x1f] %v558
  %571 = vst [vmem:[%s3 + $0x8] sm:$0x1f] %v559
  %572 = vst [vmem:[%s3 + $0x10] sm:$0x1f] %v560
  %573 = vst [vmem:[%s3 + $0x18] sm:$0x1f] %v561
  %574 = vst [vmem:[%s3 + $0x20] sm:$0x1f] %v562
  %575 = vst [vmem:[%s3 + $0x28] sm:$0x1f] %v563
  %576 = vst [vmem:[%s3 + $0x30] sm:$0x1f] %v564
  %577 = vst [vmem:[%s3 + $0x38] sm:$0x1f] %v565
  %578 = vst [vmem:[%s3 + $0x40] sm:$0x1f] %v566
  %579 = vst [vmem:[%s3 + $0x48] sm:$0x1f] %v567
  %580 = vst [vmem:[%s3 + $0x50] sm:$0x1f] %v568
  %581 = vst [vmem:[%s3 + $0x58] sm:$0x1f] %v569
  // Predicated region
  $region14: #{tpu_custom_call.1} parent=0 // pred_check
    _
  $region15: #{tpu_custom_call.1} parent=0 // pred_check_branch
    %583 = sbr.rel (0) target = $region17
  $region16: #{tpu_custom_call.1} parent=0 // pred_region
    _
  $region17: #{tpu_custom_call.1} parent=0 // pred_fallthru
    _
  // Predicated region
  $region18: #{tpu_custom_call.1} parent=0 // pred_check
    _
  $region19: #{tpu_custom_call.1} parent=0 // pred_check_branch
    %585 = sbr.rel (0) target = $region21
  $region20: #{tpu_custom_call.1} parent=0 // pred_region
    _
  $region21: #{tpu_custom_call.1} parent=0 // pred_fallthru
    _

</llo_original>
